<compile_context>
chip_gen: v5e
topology: v5e:2x2
jax: 0.10.0
libtpu: 0.0.40
codegen_flags: <defaults>
</compile_context>

<pallas_src>
import functools

import jax
import jax.numpy as jnp
from jax.experimental import pallas as pl
from jax.experimental.pallas import tpu as pltpu

IN_DIM = 32 * 32   # 1024
H1_DIM = 60
H1_PAD = 64        # fc1 width padded to an aligned 64
H2_DIM = 32
OUT_DIM = 10       # written un-padded (block dim == full array dim)


def _round_up(x, m):
    return (x + m - 1) // m * m


@functools.lru_cache(maxsize=1)
def _num_tensorcores():
    """Best-effort TensorCore count per chip (2 on v7x, else 1). Pure heuristic;
    falling back to 1 only costs the small-batch 2-way split on v7x."""
    try:
        kind = jax.devices()[0].device_kind.lower()
    except Exception:
        return 1
    return 2 if "v7" in kind else 1


def _choose_tile(batch, tb_max):
    """Batch tile: multiple of 8 (f32 sublane packing), capped at tb_max.
    On 2-TC chips keep >= 2 balanced grid steps so both cores get work; on 1-TC
    chips use a single step for small batches (no extra per-step overhead)."""
    b_al = _round_up(batch, 8)
    if b_al <= tb_max:
        if _num_tensorcores() > 1 and b_al > 8:
            return max(8, _round_up(pl.cdiv(b_al, 2), 8))
        return b_al
    return tb_max


def mlp_kernel(x_ref, w1_ref, b1_ref, w2_ref, b2_ref, w3_ref, b3_ref, o_ref):
    # In-kernel bf16 cast of x (cheap VPU work, hidden under the x DMA).
    x = x_ref[...].astype(jnp.bfloat16)                               # (tb, 1024)
    # fc1: bf16 x bf16 -> f32 accumulation on the MXU; bias/ReLU in f32 on the VPU.
    h1 = jnp.dot(x, w1_ref[...], preferred_element_type=jnp.float32) + b1_ref[...]
    h1 = jnp.maximum(h1, 0.0)                                         # (tb, 64) f32
    h2 = jnp.dot(h1.astype(jnp.bfloat16), w2_ref[...],
                 preferred_element_type=jnp.float32) + b2_ref[...]
    h2 = jnp.maximum(h2, 0.0)                                         # (tb, 32) f32
    o_ref[...] = jnp.dot(h2.astype(jnp.bfloat16), w3_ref[...],
                         preferred_element_type=jnp.float32) + b3_ref[...]


def _prepare_params(params):
    """Pad/cast PyTorch-shaped params for the kernel. Zero padding is exact:
    padded h1 columns are ReLU(0 + 0) = 0 and meet zero rows of w2."""
    w1, b1, w2, b2, w3, b3 = params
    w1p = jnp.pad(w1, ((0, 0), (0, H1_PAD - H1_DIM))).astype(jnp.bfloat16)  # (1024, 64)
    b1p = jnp.pad(b1, ((0, 0), (0, H1_PAD - H1_DIM)))                       # (1, 64) f32
    w2p = jnp.pad(w2, ((0, H1_PAD - H1_DIM), (0, 0))).astype(jnp.bfloat16)  # (64, 32)
    b2p = b2                                                                # (1, 32) f32
    w3p = w3.astype(jnp.bfloat16)                                           # (32, 10)
    b3p = b3                                                                # (1, 10) f32
    return w1p, b1p, w2p, b2p, w3p, b3p


@functools.partial(jax.jit, static_argnames=("tb",))
def custom_mlp_forward(img, params, *, tb=1024):
    """img: (B, 1, 32, 32) float32, NCHW. Returns logits (B, 10) float32."""
    B = img.shape[0]
    x = img.reshape(B, -1)                 # free view; stays f32, cast happens in-kernel

    w1, b1, w2, b2, w3, b3 = _prepare_params(params)

    tbe = _choose_tile(B, tb)
    grid = (pl.cdiv(B, tbe),)              # ragged last block handled by Pallas
    full = lambda i: (0, 0)                # weights/biases resident every step

    out = pl.pallas_call(
        mlp_kernel,
        out_shape=jax.ShapeDtypeStruct((B, OUT_DIM), jnp.float32),
        grid_spec=pltpu.PrefetchScalarGridSpec(
            num_scalar_prefetch=0,
            grid=grid,
            in_specs=[
                pl.BlockSpec((tbe, IN_DIM), lambda i: (i, 0)),   # x tile (f32, cast in-kernel)
                pl.BlockSpec((IN_DIM, H1_PAD), full),            # fc1 weight (bf16, padded cols)
                pl.BlockSpec((1, H1_PAD), full),                 # fc1 bias (f32, padded)
                pl.BlockSpec((H1_PAD, H2_DIM), full),            # fc2 weight (bf16, padded rows)
                pl.BlockSpec((1, H2_DIM), full),                 # fc2 bias (f32)
                pl.BlockSpec((H2_DIM, OUT_DIM), full),           # fc3 weight (bf16)
                pl.BlockSpec((1, OUT_DIM), full),                # fc3 bias (f32)
            ],
            out_specs=pl.BlockSpec((tbe, OUT_DIM), lambda i: (i, 0)),
        ),
        compiler_params=pltpu.CompilerParams(
            dimension_semantics=("parallel",),       # megacore sharding on 2-TC chips
            vmem_limit_bytes=32 * 1024 * 1024,       # covers tb up to ~2048 f32 rows, 2x buffered
        ),
    )(x, w1, b1, w2, b2, w3, b3)
    return out


def init_params(key):
    """Deterministic init matching PyTorch Linear shapes (stored transposed: (in, out))."""
    def linear(k, fan_in, fan_out):
        kw, kb = jax.random.split(k)
        bound = 1.0 / jnp.sqrt(fan_in)
        w = jax.random.uniform(kw, (fan_in, fan_out), jnp.float32, -bound, bound)
        b = jax.random.uniform(kb, (1, fan_out), jnp.float32, -bound, bound)
        return w, b

    k1, k2, k3 = jax.random.split(key, 3)
    w1, b1 = linear(k1, IN_DIM, H1_DIM)
    w2, b2 = linear(k2, H1_DIM, H2_DIM)
    w3, b3 = linear(k3, H2_DIM, OUT_DIM)
    return (w1, b1, w2, b2, w3, b3)


def reference_forward(img, params):
    """Pure-JAX f32 reference of the PyTorch forward."""
    w1, b1, w2, b2, w3, b3 = params
    x = img.reshape(img.shape[0], -1)
    x = jnp.maximum(x @ w1 + b1, 0.0)
    x = jnp.maximum(x @ w2 + b2, 0.0)
    return x @ w3 + b3


if __name__ == "__main__":
    key = jax.random.PRNGKey(0)
    k_img, k_params = jax.random.split(key)

    B = 64                                                         # small test batch
    img = jax.random.normal(k_img, (B, 1, 32, 32), jnp.float32)    # NCHW like PyTorch
    params = init_params(k_params)

    out = custom_mlp_forward(img, params)
    out = jax.block_until_ready(out)

    ref = reference_forward(img, params)
    assert out.shape == (B, 10)
    # bf16 inputs with f32 accumulation on all three layers: relaxed tolerance vs f32 ref.
    assert jnp.allclose(out, ref, atol=3e-2, rtol=3e-2), "mismatch vs JAX reference"

    print("KERNEL_OK")
</pallas_src>

<mosaic_0001>
module attributes {stable_mosaic.version = 11 : i64} {
  func.func @mlp_kernel(%arg0: i32, %arg1: memref<64x1024xf32, #tpu.memory_space<vmem>>, %arg2: memref<1024x64xbf16, #tpu.memory_space<vmem>>, %arg3: memref<1x64xf32, #tpu.memory_space<vmem>>, %arg4: memref<64x32xbf16, #tpu.memory_space<vmem>>, %arg5: memref<1x32xf32, #tpu.memory_space<vmem>>, %arg6: memref<32x10xbf16, #tpu.memory_space<vmem>>, %arg7: memref<1x10xf32, #tpu.memory_space<vmem>>, %arg8: memref<64x10xf32, #tpu.memory_space<vmem>>) attributes {dimension_semantics = [#tpu.dimension_semantics<parallel>], iteration_bounds = array<i64: 1>, scalar_prefetch = 0 : i64, scratch_operands = 0 : i64, tpu.core_type = #tpu.core_type<tc>, window_params = [{transform_indices = @transform_0, window_bounds = array<i64: 64, 1024>}, {pipeline_mode = #tpu.pipeline_mode<synchronous>, transform_indices = @transform_1, window_bounds = array<i64: 1024, 64>}, {pipeline_mode = #tpu.pipeline_mode<synchronous>, transform_indices = @transform_2, window_bounds = array<i64: 1, 64>}, {pipeline_mode = #tpu.pipeline_mode<synchronous>, transform_indices = @transform_3, window_bounds = array<i64: 64, 32>}, {pipeline_mode = #tpu.pipeline_mode<synchronous>, transform_indices = @transform_4, window_bounds = array<i64: 1, 32>}, {pipeline_mode = #tpu.pipeline_mode<synchronous>, transform_indices = @transform_5, window_bounds = array<i64: 32, 10>}, {pipeline_mode = #tpu.pipeline_mode<synchronous>, transform_indices = @transform_6, window_bounds = array<i64: 1, 10>}, {transform_indices = @transform_7, window_bounds = array<i64: 64, 10>}]} {
    %c0 = arith.constant 0 : index
    %c0_0 = arith.constant 0 : index
    %0 = vector.load %arg1[%c0, %c0_0] : memref<64x1024xf32, #tpu.memory_space<vmem>>, vector<64x1024xf32>
    %1 = arith.truncf %0 : vector<64x1024xf32> to vector<64x1024xbf16>
    %c0_1 = arith.constant 0 : index
    %c0_2 = arith.constant 0 : index
    %2 = vector.load %arg2[%c0_1, %c0_2] : memref<1024x64xbf16, #tpu.memory_space<vmem>>, vector<1024x64xbf16>
    %cst = arith.constant dense<0.000000e+00> : vector<64x64xf32>
    %3 = tpu.matmul %1, %2, %cst {dimension_numbers = #tpu.dot_dimension_numbers<[1], [0], [0], [1], [0, 0, 1, 1], [], []>} : vector<64x1024xbf16>, vector<1024x64xbf16>, vector<64x64xf32> -> vector<64x64xf32>
    %c0_3 = arith.constant 0 : index
    %c0_4 = arith.constant 0 : index
    %4 = vector.load %arg3[%c0_3, %c0_4] : memref<1x64xf32, #tpu.memory_space<vmem>>, vector<1x64xf32>
    %5 = vector.broadcast %4 : vector<1x64xf32> to vector<64x64xf32>
    %6 = arith.addf %3, %5 : vector<64x64xf32>
    %cst_5 = arith.constant 0.000000e+00 : f32
    %7 = vector.broadcast %cst_5 : f32 to vector<64x64xf32>
    %8 = arith.maximumf %6, %7 : vector<64x64xf32>
    %9 = arith.truncf %8 : vector<64x64xf32> to vector<64x64xbf16>
    %c0_6 = arith.constant 0 : index
    %c0_7 = arith.constant 0 : index
    %10 = vector.load %arg4[%c0_6, %c0_7] : memref<64x32xbf16, #tpu.memory_space<vmem>>, vector<64x32xbf16>
    %cst_8 = arith.constant dense<0.000000e+00> : vector<64x32xf32>
    %11 = tpu.matmul %9, %10, %cst_8 {dimension_numbers = #tpu.dot_dimension_numbers<[1], [0], [0], [1], [0, 0, 1, 1], [], []>} : vector<64x64xbf16>, vector<64x32xbf16>, vector<64x32xf32> -> vector<64x32xf32>
    %c0_9 = arith.constant 0 : index
    %c0_10 = arith.constant 0 : index
    %12 = vector.load %arg5[%c0_9, %c0_10] : memref<1x32xf32, #tpu.memory_space<vmem>>, vector<1x32xf32>
    %13 = vector.broadcast %12 : vector<1x32xf32> to vector<64x32xf32>
    %14 = arith.addf %11, %13 : vector<64x32xf32>
    %cst_11 = arith.constant 0.000000e+00 : f32
    %15 = vector.broadcast %cst_11 : f32 to vector<64x32xf32>
    %16 = arith.maximumf %14, %15 : vector<64x32xf32>
    %17 = arith.truncf %16 : vector<64x32xf32> to vector<64x32xbf16>
    %c0_12 = arith.constant 0 : index
    %c0_13 = arith.constant 0 : index
    %18 = vector.load %arg6[%c0_12, %c0_13] : memref<32x10xbf16, #tpu.memory_space<vmem>>, vector<32x10xbf16>
    %cst_14 = arith.constant dense<0.000000e+00> : vector<64x10xf32>
    %19 = tpu.matmul %17, %18, %cst_14 {dimension_numbers = #tpu.dot_dimension_numbers<[1], [0], [0], [1], [0, 0, 1, 1], [], []>} : vector<64x32xbf16>, vector<32x10xbf16>, vector<64x10xf32> -> vector<64x10xf32>
    %c0_15 = arith.constant 0 : index
    %c0_16 = arith.constant 0 : index
    %20 = vector.load %arg7[%c0_15, %c0_16] : memref<1x10xf32, #tpu.memory_space<vmem>>, vector<1x10xf32>
    %21 = vector.broadcast %20 : vector<1x10xf32> to vector<64x10xf32>
    %22 = arith.addf %19, %21 : vector<64x10xf32>
    %c0_17 = arith.constant 0 : index
    %c0_18 = arith.constant 0 : index
    %23 = vector.load %arg8[%c0_17, %c0_18] : memref<64x10xf32, #tpu.memory_space<vmem>>, vector<64x10xf32>
    tpu.vector_store %arg8[%c0_17, %c0_18], %22 {strides = array<i32>} : memref<64x10xf32, #tpu.memory_space<vmem>>, vector<64x10xf32>,
    return
  }
  func.func @transform_0(%arg0: i32) -> (i32, i32) {
    %c0_i32 = arith.constant 0 : i32
    %c0_i32_0 = arith.constant 0 : i32
    return %arg0, %c0_i32 : i32, i32
  }
  func.func @transform_1(%arg0: i32) -> (i32, i32) {
    %c0_i32 = arith.constant 0 : i32
    %c0_i32_0 = arith.constant 0 : i32
    %c0_i32_1 = arith.constant 0 : i32
    return %c0_i32, %c0_i32_0 : i32, i32
  }
  func.func @transform_2(%arg0: i32) -> (i32, i32) {
    %c0_i32 = arith.constant 0 : i32
    %c0_i32_0 = arith.constant 0 : i32
    %c0_i32_1 = arith.constant 0 : i32
    return %c0_i32, %c0_i32_0 : i32, i32
  }
  func.func @transform_3(%arg0: i32) -> (i32, i32) {
    %c0_i32 = arith.constant 0 : i32
    %c0_i32_0 = arith.constant 0 : i32
    %c0_i32_1 = arith.constant 0 : i32
    return %c0_i32, %c0_i32_0 : i32, i32
  }
  func.func @transform_4(%arg0: i32) -> (i32, i32) {
    %c0_i32 = arith.constant 0 : i32
    %c0_i32_0 = arith.constant 0 : i32
    %c0_i32_1 = arith.constant 0 : i32
    return %c0_i32, %c0_i32_0 : i32, i32
  }
  func.func @transform_5(%arg0: i32) -> (i32, i32) {
    %c0_i32 = arith.constant 0 : i32
    %c0_i32_0 = arith.constant 0 : i32
    %c0_i32_1 = arith.constant 0 : i32
    return %c0_i32, %c0_i32_0 : i32, i32
  }
  func.func @transform_6(%arg0: i32) -> (i32, i32) {
    %c0_i32 = arith.constant 0 : i32
    %c0_i32_0 = arith.constant 0 : i32
    %c0_i32_1 = arith.constant 0 : i32
    return %c0_i32, %c0_i32_0 : i32, i32
  }
  func.func @transform_7(%arg0: i32) -> (i32, i32) {
    %c0_i32 = arith.constant 0 : i32
    %c0_i32_0 = arith.constant 0 : i32
    return %arg0, %c0_i32 : i32, i32
  }
}

</mosaic_0001>

<llo_original>
// kernel: custom_mlp_forward.1
$region0: #{custom_mlp_forward.1}
  #allocation0 [shape = 'u32[]', space=smem, size = 0x4, offset = 0x4, fixed_abs, tag = 'smem constant byte address 0x4 - core index']
  #allocation1 [shape = 'u32[72,128]{1,0:T(1,128)}', space=vmem, size = 0x9000, scoped, tag = 'internal scratch']
  %s0 = inlined_call_operand.vmem [shape: f32[64,1024], index: 0, kind: input, shape index: {}]
  %s1 = inlined_call_operand.vmem [shape: bf16[1024,64], index: 1, kind: input, shape index: {}]
  %s2 = inlined_call_operand.vmem [shape: f32[1,64], index: 2, kind: input, shape index: {}]
  %s3 = inlined_call_operand.vmem [shape: bf16[64,32], index: 3, kind: input, shape index: {}]
  %s4 = inlined_call_operand.vmem [shape: f32[1,32], index: 4, kind: input, shape index: {}]
  %s5 = inlined_call_operand.vmem [shape: bf16[32,10], index: 5, kind: input, shape index: {}]
  %s6 = inlined_call_operand.vmem [shape: f32[1,10], index: 6, kind: input, shape index: {}]
  %s7 = inlined_call_operand.vmem [shape: f32[64,10], index: 7, kind: output, shape index: {}]
  %s8 = sld [smem:[#allocation0]]
  $region38: #{custom_mlp_forward.1} parent=0
    _
  %s10 = ssub.s32 1, %s8
  %s11 = scalar_select 0, %s10, %s8
  // Predicated region
  $region2: #{custom_mlp_forward.1} parent=0 // pred_check
    _
  $region3: #{custom_mlp_forward.1} parent=0 // pred_check_branch
    %13 = sbr.rel (0) target = $region5
  $region4: #{custom_mlp_forward.1} parent=0 // pred_region
    _
  $region5: #{custom_mlp_forward.1} parent=0 // pred_fallthru
    _
  // Predicated region
  $region6: #{custom_mlp_forward.1} parent=0 // pred_check
    _
  $region7: #{custom_mlp_forward.1} parent=0 // pred_check_branch
    %15 = sbr.rel (0) target = $region9
  $region8: #{custom_mlp_forward.1} parent=0 // pred_region
    _
  $region9: #{custom_mlp_forward.1} parent=0 // pred_fallthru
    _
  // Predicated region
  $region10: #{custom_mlp_forward.1} parent=0 // pred_check
    _
  $region11: #{custom_mlp_forward.1} parent=0 // pred_check_branch
    %17 = sbr.rel (0) target = $region13
  $region12: #{custom_mlp_forward.1} parent=0 // pred_region
    _
  $region13: #{custom_mlp_forward.1} parent=0 // pred_fallthru
    _
  // Predicated region
  $region14: #{custom_mlp_forward.1} parent=0 // pred_check
    _
  $region15: #{custom_mlp_forward.1} parent=0 // pred_check_branch
    %19 = sbr.rel (0) target = $region17
  $region16: #{custom_mlp_forward.1} parent=0 // pred_region
    _
  $region17: #{custom_mlp_forward.1} parent=0 // pred_fallthru
    _
  // Predicated region
  $region18: #{custom_mlp_forward.1} parent=0 // pred_check
    _
  $region19: #{custom_mlp_forward.1} parent=0 // pred_check_branch
    %21 = sbr.rel (0) target = $region21
  $region20: #{custom_mlp_forward.1} parent=0 // pred_region
    _
  $region21: #{custom_mlp_forward.1} parent=0 // pred_fallthru
    _
  // Predicated region
  $region22: #{custom_mlp_forward.1} parent=0 // pred_check
    _
  $region23: #{custom_mlp_forward.1} parent=0 // pred_check_branch
    %23 = sbr.rel (0) target = $region25
  $region24: #{custom_mlp_forward.1} parent=0 // pred_region
    _
  $region25: #{custom_mlp_forward.1} parent=0 // pred_fallthru
    _
  // Predicated region
  $region26: #{custom_mlp_forward.1} parent=0 // pred_check
    _
  $region27: #{custom_mlp_forward.1} parent=0 // pred_check_branch
    %25 = sbr.rel (0) target = $region29
  $region28: #{custom_mlp_forward.1} parent=0 // pred_region
    _
  $region29: #{custom_mlp_forward.1} parent=0 // pred_fallthru
    _
  %v27 = vld [vmem:[%s0] sm:$0xff]
  %v28 = vld [vmem:[%s0 + $0x8] sm:$0xff]
  %v29 = vld [vmem:[%s0 + $0x10] sm:$0xff]
  %v30 = vld [vmem:[%s0 + $0x18] sm:$0xff]
  %v31 = vld [vmem:[%s0 + $0x20] sm:$0xff]
  %v32 = vld [vmem:[%s0 + $0x28] sm:$0xff]
  %v33 = vld [vmem:[%s0 + $0x30] sm:$0xff]
  %v34 = vld [vmem:[%s0 + $0x38] sm:$0xff]
  %v35 = vld [vmem:[%s0 + $0x40] sm:$0xff]
  %v36 = vld [vmem:[%s0 + $0x48] sm:$0xff]
  %v37 = vld [vmem:[%s0 + $0x50] sm:$0xff]
  %v38 = vld [vmem:[%s0 + $0x58] sm:$0xff]
  %v39 = vld [vmem:[%s0 + $0x60] sm:$0xff]
  %v40 = vld [vmem:[%s0 + $0x68] sm:$0xff]
  %v41 = vld [vmem:[%s0 + $0x70] sm:$0xff]
  %v42 = vld [vmem:[%s0 + $0x78] sm:$0xff]
  %v43 = vld [vmem:[%s0 + $0x80] sm:$0xff]
  %v44 = vld [vmem:[%s0 + $0x88] sm:$0xff]
  %v45 = vld [vmem:[%s0 + $0x90] sm:$0xff]
  %v46 = vld [vmem:[%s0 + $0x98] sm:$0xff]
  %v47 = vld [vmem:[%s0 + $0xa0] sm:$0xff]
  %v48 = vld [vmem:[%s0 + $0xa8] sm:$0xff]
  %v49 = vld [vmem:[%s0 + $0xb0] sm:$0xff]
  %v50 = vld [vmem:[%s0 + $0xb8] sm:$0xff]
  %v51 = vld [vmem:[%s0 + $0xc0] sm:$0xff]
  %v52 = vld [vmem:[%s0 + $0xc8] sm:$0xff]
  %v53 = vld [vmem:[%s0 + $0xd0] sm:$0xff]
  %v54 = vld [vmem:[%s0 + $0xd8] sm:$0xff]
  %v55 = vld [vmem:[%s0 + $0xe0] sm:$0xff]
  %v56 = vld [vmem:[%s0 + $0xe8] sm:$0xff]
  %v57 = vld [vmem:[%s0 + $0xf0] sm:$0xff]
  %v58 = vld [vmem:[%s0 + $0xf8] sm:$0xff]
  %v59 = vld [vmem:[%s0 + $0x100] sm:$0xff]
  %v60 = vld [vmem:[%s0 + $0x108] sm:$0xff]
  %v61 = vld [vmem:[%s0 + $0x110] sm:$0xff]
  %v62 = vld [vmem:[%s0 + $0x118] sm:$0xff]
  %v63 = vld [vmem:[%s0 + $0x120] sm:$0xff]
  %v64 = vld [vmem:[%s0 + $0x128] sm:$0xff]
  %v65 = vld [vmem:[%s0 + $0x130] sm:$0xff]
  %v66 = vld [vmem:[%s0 + $0x138] sm:$0xff]
  %v67 = vld [vmem:[%s0 + $0x140] sm:$0xff]
  %v68 = vld [vmem:[%s0 + $0x148] sm:$0xff]
  %v69 = vld [vmem:[%s0 + $0x150] sm:$0xff]
  %v70 = vld [vmem:[%s0 + $0x158] sm:$0xff]
  %v71 = vld [vmem:[%s0 + $0x160] sm:$0xff]
  %v72 = vld [vmem:[%s0 + $0x168] sm:$0xff]
  %v73 = vld [vmem:[%s0 + $0x170] sm:$0xff]
  %v74 = vld [vmem:[%s0 + $0x178] sm:$0xff]
  %v75 = vld [vmem:[%s0 + $0x180] sm:$0xff]
  %v76 = vld [vmem:[%s0 + $0x188] sm:$0xff]
  %v77 = vld [vmem:[%s0 + $0x190] sm:$0xff]
  %v78 = vld [vmem:[%s0 + $0x198] sm:$0xff]
  %v79 = vld [vmem:[%s0 + $0x1a0] sm:$0xff]
  %v80 = vld [vmem:[%s0 + $0x1a8] sm:$0xff]
  %v81 = vld [vmem:[%s0 + $0x1b0] sm:$0xff]
  %v82 = vld [vmem:[%s0 + $0x1b8] sm:$0xff]
  %v83 = vld [vmem:[%s0 + $0x1c0] sm:$0xff]
  %v84 = vld [vmem:[%s0 + $0x1c8] sm:$0xff]
  %v85 = vld [vmem:[%s0 + $0x1d0] sm:$0xff]
  %v86 = vld [vmem:[%s0 + $0x1d8] sm:$0xff]
  %v87 = vld [vmem:[%s0 + $0x1e0] sm:$0xff]
  %v88 = vld [vmem:[%s0 + $0x1e8] sm:$0xff]
  %v89 = vld [vmem:[%s0 + $0x1f0] sm:$0xff]
  %v90 = vld [vmem:[%s0 + $0x1f8] sm:$0xff]
  %v91 = vpack.c.bf16 %v35, %v27
  %v92 = vpack.c.bf16 %v36, %v28
  %v93 = vpack.c.bf16 %v37, %v29
  %v94 = vpack.c.bf16 %v38, %v30
  %v95 = vpack.c.bf16 %v39, %v31
  %v96 = vpack.c.bf16 %v40, %v32
  %v97 = vpack.c.bf16 %v41, %v33
  %v98 = vpack.c.bf16 %v42, %v34
  %v99 = vpack.c.bf16 %v51, %v43
  %v100 = vpack.c.bf16 %v52, %v44
  %v101 = vpack.c.bf16 %v53, %v45
  %v102 = vpack.c.bf16 %v54, %v46
  %v103 = vpack.c.bf16 %v55, %v47
  %v104 = vpack.c.bf16 %v56, %v48
  %v105 = vpack.c.bf16 %v57, %v49
  %v106 = vpack.c.bf16 %v58, %v50
  %v107 = vpack.c.bf16 %v67, %v59
  %v108 = vpack.c.bf16 %v68, %v60
  %v109 = vpack.c.bf16 %v69, %v61
  %v110 = vpack.c.bf16 %v70, %v62
  %v111 = vpack.c.bf16 %v71, %v63
  %v112 = vpack.c.bf16 %v72, %v64
  %v113 = vpack.c.bf16 %v73, %v65
  %v114 = vpack.c.bf16 %v74, %v66
  %v115 = vpack.c.bf16 %v83, %v75
  %v116 = vpack.c.bf16 %v84, %v76
  %v117 = vpack.c.bf16 %v85, %v77
  %v118 = vpack.c.bf16 %v86, %v78
  %v119 = vpack.c.bf16 %v87, %v79
  %v120 = vpack.c.bf16 %v88, %v80
  %v121 = vpack.c.bf16 %v89, %v81
  %v122 = vpack.c.bf16 %v90, %v82
  %v123 = vld [vmem:[%s1] sm:$0xf]
  %v124 = vld [vmem:[%s1 + $0x4] sm:$0xf]
  %v125 = vld [vmem:[%s1 + $0x8] sm:$0xf]
  %v126 = vld [vmem:[%s1 + $0xc] sm:$0xf]
  %v127 = vld [vmem:[%s1 + $0x10] sm:$0xf]
  %v128 = vld [vmem:[%s1 + $0x14] sm:$0xf]
  %v129 = vld [vmem:[%s1 + $0x18] sm:$0xf]
  %v130 = vld [vmem:[%s1 + $0x1c] sm:$0xf]
  %v131 = vld [vmem:[%s1 + $0x20] sm:$0xf]
  %v132 = vld [vmem:[%s1 + $0x24] sm:$0xf]
  %v133 = vld [vmem:[%s1 + $0x28] sm:$0xf]
  %v134 = vld [vmem:[%s1 + $0x2c] sm:$0xf]
  %v135 = vld [vmem:[%s1 + $0x30] sm:$0xf]
  %v136 = vld [vmem:[%s1 + $0x34] sm:$0xf]
  %v137 = vld [vmem:[%s1 + $0x38] sm:$0xf]
  %v138 = vld [vmem:[%s1 + $0x3c] sm:$0xf]
  %v139 = vld [vmem:[%s1 + $0x40] sm:$0xf]
  %v140 = vld [vmem:[%s1 + $0x44] sm:$0xf]
  %v141 = vld [vmem:[%s1 + $0x48] sm:$0xf]
  %v142 = vld [vmem:[%s1 + $0x4c] sm:$0xf]
  %v143 = vld [vmem:[%s1 + $0x50] sm:$0xf]
  %v144 = vld [vmem:[%s1 + $0x54] sm:$0xf]
  %v145 = vld [vmem:[%s1 + $0x58] sm:$0xf]
  %v146 = vld [vmem:[%s1 + $0x5c] sm:$0xf]
  %v147 = vld [vmem:[%s1 + $0x60] sm:$0xf]
  %v148 = vld [vmem:[%s1 + $0x64] sm:$0xf]
  %v149 = vld [vmem:[%s1 + $0x68] sm:$0xf]
  %v150 = vld [vmem:[%s1 + $0x6c] sm:$0xf]
  %v151 = vld [vmem:[%s1 + $0x70] sm:$0xf]
  %v152 = vld [vmem:[%s1 + $0x74] sm:$0xf]
  %v153 = vld [vmem:[%s1 + $0x78] sm:$0xf]
  %v154 = vld [vmem:[%s1 + $0x7c] sm:$0xf]
  %v155 = vld [vmem:[%s1 + $0x80] sm:$0xf]
  %v156 = vld [vmem:[%s1 + $0x84] sm:$0xf]
  %v157 = vld [vmem:[%s1 + $0x88] sm:$0xf]
  %v158 = vld [vmem:[%s1 + $0x8c] sm:$0xf]
  %v159 = vld [vmem:[%s1 + $0x90] sm:$0xf]
  %v160 = vld [vmem:[%s1 + $0x94] sm:$0xf]
  %v161 = vld [vmem:[%s1 + $0x98] sm:$0xf]
  %v162 = vld [vmem:[%s1 + $0x9c] sm:$0xf]
  %v163 = vld [vmem:[%s1 + $0xa0] sm:$0xf]
  %v164 = vld [vmem:[%s1 + $0xa4] sm:$0xf]
  %v165 = vld [vmem:[%s1 + $0xa8] sm:$0xf]
  %v166 = vld [vmem:[%s1 + $0xac] sm:$0xf]
  %v167 = vld [vmem:[%s1 + $0xb0] sm:$0xf]
  %v168 = vld [vmem:[%s1 + $0xb4] sm:$0xf]
  %v169 = vld [vmem:[%s1 + $0xb8] sm:$0xf]
  %v170 = vld [vmem:[%s1 + $0xbc] sm:$0xf]
  %v171 = vld [vmem:[%s1 + $0xc0] sm:$0xf]
  %v172 = vld [vmem:[%s1 + $0xc4] sm:$0xf]
  %v173 = vld [vmem:[%s1 + $0xc8] sm:$0xf]
  %v174 = vld [vmem:[%s1 + $0xcc] sm:$0xf]
  %v175 = vld [vmem:[%s1 + $0xd0] sm:$0xf]
  %v176 = vld [vmem:[%s1 + $0xd4] sm:$0xf]
  %v177 = vld [vmem:[%s1 + $0xd8] sm:$0xf]
  %v178 = vld [vmem:[%s1 + $0xdc] sm:$0xf]
  %v179 = vld [vmem:[%s1 + $0xe0] sm:$0xf]
  %v180 = vld [vmem:[%s1 + $0xe4] sm:$0xf]
  %v181 = vld [vmem:[%s1 + $0xe8] sm:$0xf]
  %v182 = vld [vmem:[%s1 + $0xec] sm:$0xf]
  %v183 = vld [vmem:[%s1 + $0xf0] sm:$0xf]
  %v184 = vld [vmem:[%s1 + $0xf4] sm:$0xf]
  %v185 = vld [vmem:[%s1 + $0xf8] sm:$0xf]
  %v186 = vld [vmem:[%s1 + $0xfc] sm:$0xf]
  %v187 = vld [vmem:[%s1 + $0x100] sm:$0xf]
  %v188 = vld [vmem:[%s1 + $0x104] sm:$0xf]
  %v189 = vld [vmem:[%s1 + $0x108] sm:$0xf]
  %v190 = vld [vmem:[%s1 + $0x10c] sm:$0xf]
  %v191 = vld [vmem:[%s1 + $0x110] sm:$0xf]
  %v192 = vld [vmem:[%s1 + $0x114] sm:$0xf]
  %v193 = vld [vmem:[%s1 + $0x118] sm:$0xf]
  %v194 = vld [vmem:[%s1 + $0x11c] sm:$0xf]
  %v195 = vld [vmem:[%s1 + $0x120] sm:$0xf]
  %v196 = vld [vmem:[%s1 + $0x124] sm:$0xf]
  %v197 = vld [vmem:[%s1 + $0x128] sm:$0xf]
  %v198 = vld [vmem:[%s1 + $0x12c] sm:$0xf]
  %v199 = vld [vmem:[%s1 + $0x130] sm:$0xf]
  %v200 = vld [vmem:[%s1 + $0x134] sm:$0xf]
  %v201 = vld [vmem:[%s1 + $0x138] sm:$0xf]
  %v202 = vld [vmem:[%s1 + $0x13c] sm:$0xf]
  %v203 = vld [vmem:[%s1 + $0x140] sm:$0xf]
  %v204 = vld [vmem:[%s1 + $0x144] sm:$0xf]
  %v205 = vld [vmem:[%s1 + $0x148] sm:$0xf]
  %v206 = vld [vmem:[%s1 + $0x14c] sm:$0xf]
  %v207 = vld [vmem:[%s1 + $0x150] sm:$0xf]
  %v208 = vld [vmem:[%s1 + $0x154] sm:$0xf]
  %v209 = vld [vmem:[%s1 + $0x158] sm:$0xf]
  %v210 = vld [vmem:[%s1 + $0x15c] sm:$0xf]
  %v211 = vld [vmem:[%s1 + $0x160] sm:$0xf]
  %v212 = vld [vmem:[%s1 + $0x164] sm:$0xf]
  %v213 = vld [vmem:[%s1 + $0x168] sm:$0xf]
  %v214 = vld [vmem:[%s1 + $0x16c] sm:$0xf]
  %v215 = vld [vmem:[%s1 + $0x170] sm:$0xf]
  %v216 = vld [vmem:[%s1 + $0x174] sm:$0xf]
  %v217 = vld [vmem:[%s1 + $0x178] sm:$0xf]
  %v218 = vld [vmem:[%s1 + $0x17c] sm:$0xf]
  %v219 = vld [vmem:[%s1 + $0x180] sm:$0xf]
  %v220 = vld [vmem:[%s1 + $0x184] sm:$0xf]
  %v221 = vld [vmem:[%s1 + $0x188] sm:$0xf]
  %v222 = vld [vmem:[%s1 + $0x18c] sm:$0xf]
  %v223 = vld [vmem:[%s1 + $0x190] sm:$0xf]
  %v224 = vld [vmem:[%s1 + $0x194] sm:$0xf]
  %v225 = vld [vmem:[%s1 + $0x198] sm:$0xf]
  %v226 = vld [vmem:[%s1 + $0x19c] sm:$0xf]
  %v227 = vld [vmem:[%s1 + $0x1a0] sm:$0xf]
  %v228 = vld [vmem:[%s1 + $0x1a4] sm:$0xf]
  %v229 = vld [vmem:[%s1 + $0x1a8] sm:$0xf]
  %v230 = vld [vmem:[%s1 + $0x1ac] sm:$0xf]
  %v231 = vld [vmem:[%s1 + $0x1b0] sm:$0xf]
  %v232 = vld [vmem:[%s1 + $0x1b4] sm:$0xf]
  %v233 = vld [vmem:[%s1 + $0x1b8] sm:$0xf]
  %v234 = vld [vmem:[%s1 + $0x1bc] sm:$0xf]
  %v235 = vld [vmem:[%s1 + $0x1c0] sm:$0xf]
  %v236 = vld [vmem:[%s1 + $0x1c4] sm:$0xf]
  %v237 = vld [vmem:[%s1 + $0x1c8] sm:$0xf]
  %v238 = vld [vmem:[%s1 + $0x1cc] sm:$0xf]
  %v239 = vld [vmem:[%s1 + $0x1d0] sm:$0xf]
  %v240 = vld [vmem:[%s1 + $0x1d4] sm:$0xf]
  %v241 = vld [vmem:[%s1 + $0x1d8] sm:$0xf]
  %v242 = vld [vmem:[%s1 + $0x1dc] sm:$0xf]
  %v243 = vld [vmem:[%s1 + $0x1e0] sm:$0xf]
  %v244 = vld [vmem:[%s1 + $0x1e4] sm:$0xf]
  %v245 = vld [vmem:[%s1 + $0x1e8] sm:$0xf]
  %v246 = vld [vmem:[%s1 + $0x1ec] sm:$0xf]
  %v247 = vld [vmem:[%s1 + $0x1f0] sm:$0xf]
  %v248 = vld [vmem:[%s1 + $0x1f4] sm:$0xf]
  %v249 = vld [vmem:[%s1 + $0x1f8] sm:$0xf]
  %v250 = vld [vmem:[%s1 + $0x1fc] sm:$0xf]
  %v251 = vld [vmem:[%s2] sm:$0x1]
  %v253 = vperm.slane %v251, 0
  %v383 = vunpack.c.l.b16 %v123
  %v384 = vunpack.c.l.b16 %v124
  %v385 = vunpack.c.l.b16 %v125
  %v386 = vunpack.c.l.b16 %v126
  %v387 = vunpack.c.l.b16 %v127
  %v388 = vunpack.c.l.b16 %v128
  %v389 = vunpack.c.l.b16 %v129
  %v390 = vunpack.c.l.b16 %v130
  %v391 = vunpack.c.l.b16 %v131
  %v392 = vunpack.c.l.b16 %v132
  %v393 = vunpack.c.l.b16 %v133
  %v394 = vunpack.c.l.b16 %v134
  %v395 = vunpack.c.l.b16 %v135
  %v396 = vunpack.c.l.b16 %v136
  %v397 = vunpack.c.l.b16 %v137
  %v398 = vunpack.c.l.b16 %v138
  %v399 = vunpack.c.l.b16 %v139
  %v400 = vunpack.c.l.b16 %v140
  %v401 = vunpack.c.l.b16 %v141
  %v402 = vunpack.c.l.b16 %v142
  %v403 = vunpack.c.l.b16 %v143
  %v404 = vunpack.c.l.b16 %v144
  %v405 = vunpack.c.l.b16 %v145
  %v406 = vunpack.c.l.b16 %v146
  %v407 = vunpack.c.l.b16 %v147
  %v408 = vunpack.c.l.b16 %v148
  %v409 = vunpack.c.l.b16 %v149
  %v410 = vunpack.c.l.b16 %v150
  %v411 = vunpack.c.l.b16 %v151
  %v412 = vunpack.c.l.b16 %v152
  %v413 = vunpack.c.l.b16 %v153
  %v414 = vunpack.c.l.b16 %v154
  %v415 = vunpack.c.l.b16 %v155
  %v416 = vunpack.c.l.b16 %v156
  %v417 = vunpack.c.l.b16 %v157
  %v418 = vunpack.c.l.b16 %v158
  %v419 = vunpack.c.l.b16 %v159
  %v420 = vunpack.c.l.b16 %v160
  %v421 = vunpack.c.l.b16 %v161
  %v422 = vunpack.c.l.b16 %v162
  %v423 = vunpack.c.l.b16 %v163
  %v424 = vunpack.c.l.b16 %v164
  %v425 = vunpack.c.l.b16 %v165
  %v426 = vunpack.c.l.b16 %v166
  %v427 = vunpack.c.l.b16 %v167
  %v428 = vunpack.c.l.b16 %v168
  %v429 = vunpack.c.l.b16 %v169
  %v430 = vunpack.c.l.b16 %v170
  %v431 = vunpack.c.l.b16 %v171
  %v432 = vunpack.c.l.b16 %v172
  %v433 = vunpack.c.l.b16 %v173
  %v434 = vunpack.c.l.b16 %v174
  %v435 = vunpack.c.l.b16 %v175
  %v436 = vunpack.c.l.b16 %v176
  %v437 = vunpack.c.l.b16 %v177
  %v438 = vunpack.c.l.b16 %v178
  %v439 = vunpack.c.l.b16 %v179
  %v440 = vunpack.c.l.b16 %v180
  %v441 = vunpack.c.l.b16 %v181
  %v442 = vunpack.c.l.b16 %v182
  %v443 = vunpack.c.l.b16 %v183
  %v444 = vunpack.c.l.b16 %v184
  %v445 = vunpack.c.l.b16 %v185
  %v446 = vunpack.c.l.b16 %v186
  %v447 = vunpack.c.l.b16 %v187
  %v448 = vunpack.c.l.b16 %v188
  %v449 = vunpack.c.l.b16 %v189
  %v450 = vunpack.c.l.b16 %v190
  %v451 = vunpack.c.l.b16 %v191
  %v452 = vunpack.c.l.b16 %v192
  %v453 = vunpack.c.l.b16 %v193
  %v454 = vunpack.c.l.b16 %v194
  %v455 = vunpack.c.l.b16 %v195
  %v456 = vunpack.c.l.b16 %v196
  %v457 = vunpack.c.l.b16 %v197
  %v458 = vunpack.c.l.b16 %v198
  %v459 = vunpack.c.l.b16 %v199
  %v460 = vunpack.c.l.b16 %v200
  %v461 = vunpack.c.l.b16 %v201
  %v462 = vunpack.c.l.b16 %v202
  %v463 = vunpack.c.l.b16 %v203
  %v464 = vunpack.c.l.b16 %v204
  %v465 = vunpack.c.l.b16 %v205
  %v466 = vunpack.c.l.b16 %v206
  %v467 = vunpack.c.l.b16 %v207
  %v468 = vunpack.c.l.b16 %v208
  %v469 = vunpack.c.l.b16 %v209
  %v470 = vunpack.c.l.b16 %v210
  %v471 = vunpack.c.l.b16 %v211
  %v472 = vunpack.c.l.b16 %v212
  %v473 = vunpack.c.l.b16 %v213
  %v474 = vunpack.c.l.b16 %v214
  %v475 = vunpack.c.l.b16 %v215
  %v476 = vunpack.c.l.b16 %v216
  %v477 = vunpack.c.l.b16 %v217
  %v478 = vunpack.c.l.b16 %v218
  %v479 = vunpack.c.l.b16 %v219
  %v480 = vunpack.c.l.b16 %v220
  %v481 = vunpack.c.l.b16 %v221
  %v482 = vunpack.c.l.b16 %v222
  %v483 = vunpack.c.l.b16 %v223
  %v484 = vunpack.c.l.b16 %v224
  %v485 = vunpack.c.l.b16 %v225
  %v486 = vunpack.c.l.b16 %v226
  %v487 = vunpack.c.l.b16 %v227
  %v488 = vunpack.c.l.b16 %v228
  %v489 = vunpack.c.l.b16 %v229
  %v490 = vunpack.c.l.b16 %v230
  %v491 = vunpack.c.l.b16 %v231
  %v492 = vunpack.c.l.b16 %v232
  %v493 = vunpack.c.l.b16 %v233
  %v494 = vunpack.c.l.b16 %v234
  %v495 = vunpack.c.l.b16 %v235
  %v496 = vunpack.c.l.b16 %v236
  %v497 = vunpack.c.l.b16 %v237
  %v498 = vunpack.c.l.b16 %v238
  %v499 = vunpack.c.l.b16 %v239
  %v500 = vunpack.c.l.b16 %v240
  %v501 = vunpack.c.l.b16 %v241
  %v502 = vunpack.c.l.b16 %v242
  %v503 = vunpack.c.l.b16 %v243
  %v504 = vunpack.c.l.b16 %v244
  %v505 = vunpack.c.l.b16 %v245
  %v506 = vunpack.c.l.b16 %v246
  %v507 = vunpack.c.l.b16 %v247
  %v508 = vunpack.c.l.b16 %v248
  %v509 = vunpack.c.l.b16 %v249
  %v510 = vunpack.c.l.b16 %v250
  %v511 = vpack.c.b16 %v384, %v383
  %v512 = vpack.c.b16 %v386, %v385
  %v513 = vpack.c.b16 %v388, %v387
  %v514 = vpack.c.b16 %v390, %v389
  %v515 = vpack.c.b16 %v392, %v391
  %v516 = vpack.c.b16 %v394, %v393
  %v517 = vpack.c.b16 %v396, %v395
  %v518 = vpack.c.b16 %v398, %v397
  %v519 = vpack.c.b16 %v400, %v399
  %v520 = vpack.c.b16 %v402, %v401
  %v521 = vpack.c.b16 %v404, %v403
  %v522 = vpack.c.b16 %v406, %v405
  %v523 = vpack.c.b16 %v408, %v407
  %v524 = vpack.c.b16 %v410, %v409
  %v525 = vpack.c.b16 %v412, %v411
  %v526 = vpack.c.b16 %v414, %v413
  %v527 = vpack.c.b16 %v416, %v415
  %v528 = vpack.c.b16 %v418, %v417
  %v529 = vpack.c.b16 %v420, %v419
  %v530 = vpack.c.b16 %v422, %v421
  %v531 = vpack.c.b16 %v424, %v423
  %v532 = vpack.c.b16 %v426, %v425
  %v533 = vpack.c.b16 %v428, %v427
  %v534 = vpack.c.b16 %v430, %v429
  %v535 = vpack.c.b16 %v432, %v431
  %v536 = vpack.c.b16 %v434, %v433
  %v537 = vpack.c.b16 %v436, %v435
  %v538 = vpack.c.b16 %v438, %v437
  %v539 = vpack.c.b16 %v440, %v439
  %v540 = vpack.c.b16 %v442, %v441
  %v541 = vpack.c.b16 %v444, %v443
  %v542 = vpack.c.b16 %v446, %v445
  %v543 = vpack.c.b16 %v448, %v447
  %v544 = vpack.c.b16 %v450, %v449
  %v545 = vpack.c.b16 %v452, %v451
  %v546 = vpack.c.b16 %v454, %v453
  %v547 = vpack.c.b16 %v456, %v455
  %v548 = vpack.c.b16 %v458, %v457
  %v549 = vpack.c.b16 %v460, %v459
  %v550 = vpack.c.b16 %v462, %v461
  %v551 = vpack.c.b16 %v464, %v463
  %v552 = vpack.c.b16 %v466, %v465
  %v553 = vpack.c.b16 %v468, %v467
  %v554 = vpack.c.b16 %v470, %v469
  %v555 = vpack.c.b16 %v472, %v471
  %v556 = vpack.c.b16 %v474, %v473
  %v557 = vpack.c.b16 %v476, %v475
  %v558 = vpack.c.b16 %v478, %v477
  %v559 = vpack.c.b16 %v480, %v479
  %v560 = vpack.c.b16 %v482, %v481
  %v561 = vpack.c.b16 %v484, %v483
  %v562 = vpack.c.b16 %v486, %v485
  %v563 = vpack.c.b16 %v488, %v487
  %v564 = vpack.c.b16 %v490, %v489
  %v565 = vpack.c.b16 %v492, %v491
  %v566 = vpack.c.b16 %v494, %v493
  %v567 = vpack.c.b16 %v496, %v495
  %v568 = vpack.c.b16 %v498, %v497
  %v569 = vpack.c.b16 %v500, %v499
  %v570 = vpack.c.b16 %v502, %v501
  %v571 = vpack.c.b16 %v504, %v503
  %v572 = vpack.c.b16 %v506, %v505
  %v573 = vpack.c.b16 %v508, %v507
  %v574 = vpack.c.b16 %v510, %v509
  %639 = vmatpush.bf16.msra.mxu0 %v518
  %640 = vmatpush.bf16.msra.mxu0 %v517
  %641 = vmatpush.bf16.msra.mxu0 %v516
  %642 = vmatpush.bf16.msra.mxu0 %v515
  %643 = vmatpush.bf16.msra.mxu0 %v514
  %644 = vmatpush.bf16.msra.mxu0 %v513
  %645 = vmatpush.bf16.msra.mxu0 %v512
  %646 = vmatpush.bf16.msra.mxu0 %v511
  %647 = vmatmul.bf16.gmra.mxu0 %v91
  %v648 = vpop.f32.mrf.mxu0
  %v649 = vadd.f32 %v253, %v648
  %v650 = vpop.f32.mrf.mxu0
  %v651 = vadd.f32 %v253, %v650
  %652 = vmatmul.bf16.gmra.mxu0 %v99
  %v653 = vpop.f32.mrf.mxu0
  %v654 = vadd.f32 %v253, %v653
  %v655 = vpop.f32.mrf.mxu0
  %v656 = vadd.f32 %v253, %v655
  %657 = vmatmul.bf16.gmra.mxu0 %v107
  %v658 = vpop.f32.mrf.mxu0
  %v659 = vadd.f32 %v253, %v658
  %v660 = vpop.f32.mrf.mxu0
  %v661 = vadd.f32 %v253, %v660
  %662 = vmatmul.bf16.gmra.mxu0 %v115
  %v663 = vpop.f32.mrf.mxu0
  %v664 = vadd.f32 %v253, %v663
  %v665 = vpop.f32.mrf.mxu0
  %v666 = vadd.f32 %v253, %v665
  %667 = vdwg.mxu0
  %668 = vmatpush.bf16.msra.mxu0 %v526
  %669 = vmatpush.bf16.msra.mxu0 %v525
  %670 = vmatpush.bf16.msra.mxu0 %v524
  %671 = vmatpush.bf16.msra.mxu0 %v523
  %672 = vmatpush.bf16.msra.mxu0 %v522
  %673 = vmatpush.bf16.msra.mxu0 %v521
  %674 = vmatpush.bf16.msra.mxu0 %v520
  %675 = vmatpush.bf16.msra.mxu0 %v519
  %676 = vmatmul.bf16.gmra.mxu0 %v92
  %v677 = vpop.f32.mrf.mxu0
  %v678 = vadd.f32 %v649, %v677
  %v679 = vpop.f32.mrf.mxu0
  %v680 = vadd.f32 %v651, %v679
  %681 = vmatmul.bf16.gmra.mxu0 %v100
  %v682 = vpop.f32.mrf.mxu0
  %v683 = vadd.f32 %v654, %v682
  %v684 = vpop.f32.mrf.mxu0
  %v685 = vadd.f32 %v656, %v684
  %686 = vmatmul.bf16.gmra.mxu0 %v108
  %v687 = vpop.f32.mrf.mxu0
  %v688 = vadd.f32 %v659, %v687
  %v689 = vpop.f32.mrf.mxu0
  %v690 = vadd.f32 %v661, %v689
  %691 = vmatmul.bf16.gmra.mxu0 %v116
  %v692 = vpop.f32.mrf.mxu0
  %v693 = vadd.f32 %v664, %v692
  %v694 = vpop.f32.mrf.mxu0
  %v695 = vadd.f32 %v666, %v694
  %696 = vdwg.mxu0
  %697 = vmatpush.bf16.msra.mxu0 %v534
  %698 = vmatpush.bf16.msra.mxu0 %v533
  %699 = vmatpush.bf16.msra.mxu0 %v532
  %700 = vmatpush.bf16.msra.mxu0 %v531
  %701 = vmatpush.bf16.msra.mxu0 %v530
  %702 = vmatpush.bf16.msra.mxu0 %v529
  %703 = vmatpush.bf16.msra.mxu0 %v528
  %704 = vmatpush.bf16.msra.mxu0 %v527
  %705 = vmatmul.bf16.gmra.mxu0 %v93
  %v706 = vpop.f32.mrf.mxu0
  %v707 = vadd.f32 %v678, %v706
  %v708 = vpop.f32.mrf.mxu0
  %v709 = vadd.f32 %v680, %v708
  %710 = vmatmul.bf16.gmra.mxu0 %v101
  %v711 = vpop.f32.mrf.mxu0
  %v712 = vadd.f32 %v683, %v711
  %v713 = vpop.f32.mrf.mxu0
  %v714 = vadd.f32 %v685, %v713
  %715 = vmatmul.bf16.gmra.mxu0 %v109
  %v716 = vpop.f32.mrf.mxu0
  %v717 = vadd.f32 %v688, %v716
  %v718 = vpop.f32.mrf.mxu0
  %v719 = vadd.f32 %v690, %v718
  %720 = vmatmul.bf16.gmra.mxu0 %v117
  %v721 = vpop.f32.mrf.mxu0
  %v722 = vadd.f32 %v693, %v721
  %v723 = vpop.f32.mrf.mxu0
  %v724 = vadd.f32 %v695, %v723
  %725 = vdwg.mxu0
  %726 = vmatpush.bf16.msra.mxu0 %v542
  %727 = vmatpush.bf16.msra.mxu0 %v541
  %728 = vmatpush.bf16.msra.mxu0 %v540
  %729 = vmatpush.bf16.msra.mxu0 %v539
  %730 = vmatpush.bf16.msra.mxu0 %v538
  %731 = vmatpush.bf16.msra.mxu0 %v537
  %732 = vmatpush.bf16.msra.mxu0 %v536
  %733 = vmatpush.bf16.msra.mxu0 %v535
  %734 = vmatmul.bf16.gmra.mxu0 %v94
  %v735 = vpop.f32.mrf.mxu0
  %v736 = vadd.f32 %v707, %v735
  %v737 = vpop.f32.mrf.mxu0
  %v738 = vadd.f32 %v709, %v737
  %739 = vmatmul.bf16.gmra.mxu0 %v102
  %v740 = vpop.f32.mrf.mxu0
  %v741 = vadd.f32 %v712, %v740
  %v742 = vpop.f32.mrf.mxu0
  %v743 = vadd.f32 %v714, %v742
  %744 = vmatmul.bf16.gmra.mxu0 %v110
  %v745 = vpop.f32.mrf.mxu0
  %v746 = vadd.f32 %v717, %v745
  %v747 = vpop.f32.mrf.mxu0
  %v748 = vadd.f32 %v719, %v747
  %749 = vmatmul.bf16.gmra.mxu0 %v118
  %v750 = vpop.f32.mrf.mxu0
  %v751 = vadd.f32 %v722, %v750
  %v752 = vpop.f32.mrf.mxu0
  %v753 = vadd.f32 %v724, %v752
  %754 = vdwg.mxu0
  %755 = vmatpush.bf16.msra.mxu0 %v550
  %756 = vmatpush.bf16.msra.mxu0 %v549
  %757 = vmatpush.bf16.msra.mxu0 %v548
  %758 = vmatpush.bf16.msra.mxu0 %v547
  %759 = vmatpush.bf16.msra.mxu0 %v546
  %760 = vmatpush.bf16.msra.mxu0 %v545
  %761 = vmatpush.bf16.msra.mxu0 %v544
  %762 = vmatpush.bf16.msra.mxu0 %v543
  %763 = vmatmul.bf16.gmra.mxu0 %v95
  %v764 = vpop.f32.mrf.mxu0
  %v765 = vadd.f32 %v736, %v764
  %v766 = vpop.f32.mrf.mxu0
  %v767 = vadd.f32 %v738, %v766
  %768 = vmatmul.bf16.gmra.mxu0 %v103
  %v769 = vpop.f32.mrf.mxu0
  %v770 = vadd.f32 %v741, %v769
  %v771 = vpop.f32.mrf.mxu0
  %v772 = vadd.f32 %v743, %v771
  %773 = vmatmul.bf16.gmra.mxu0 %v111
  %v774 = vpop.f32.mrf.mxu0
  %v775 = vadd.f32 %v746, %v774
  %v776 = vpop.f32.mrf.mxu0
  %v777 = vadd.f32 %v748, %v776
  %778 = vmatmul.bf16.gmra.mxu0 %v119
  %v779 = vpop.f32.mrf.mxu0
  %v780 = vadd.f32 %v751, %v779
  %v781 = vpop.f32.mrf.mxu0
  %v782 = vadd.f32 %v753, %v781
  %783 = vdwg.mxu0
  %784 = vmatpush.bf16.msra.mxu0 %v558
  %785 = vmatpush.bf16.msra.mxu0 %v557
  %786 = vmatpush.bf16.msra.mxu0 %v556
  %787 = vmatpush.bf16.msra.mxu0 %v555
  %788 = vmatpush.bf16.msra.mxu0 %v554
  %789 = vmatpush.bf16.msra.mxu0 %v553
  %790 = vmatpush.bf16.msra.mxu0 %v552
  %791 = vmatpush.bf16.msra.mxu0 %v551
  %792 = vmatmul.bf16.gmra.mxu0 %v96
  %v793 = vpop.f32.mrf.mxu0
  %v794 = vadd.f32 %v765, %v793
  %v795 = vpop.f32.mrf.mxu0
  %v796 = vadd.f32 %v767, %v795
  %797 = vmatmul.bf16.gmra.mxu0 %v104
  %v798 = vpop.f32.mrf.mxu0
  %v799 = vadd.f32 %v770, %v798
  %v800 = vpop.f32.mrf.mxu0
  %v801 = vadd.f32 %v772, %v800
  %802 = vmatmul.bf16.gmra.mxu0 %v112
  %v803 = vpop.f32.mrf.mxu0
  %v804 = vadd.f32 %v775, %v803
  %v805 = vpop.f32.mrf.mxu0
  %v806 = vadd.f32 %v777, %v805
  %807 = vmatmul.bf16.gmra.mxu0 %v120
  %v808 = vpop.f32.mrf.mxu0
  %v809 = vadd.f32 %v780, %v808
  %v810 = vpop.f32.mrf.mxu0
  %v811 = vadd.f32 %v782, %v810
  %812 = vdwg.mxu0
  %813 = vmatpush.bf16.msra.mxu0 %v566
  %814 = vmatpush.bf16.msra.mxu0 %v565
  %815 = vmatpush.bf16.msra.mxu0 %v564
  %816 = vmatpush.bf16.msra.mxu0 %v563
  %817 = vmatpush.bf16.msra.mxu0 %v562
  %818 = vmatpush.bf16.msra.mxu0 %v561
  %819 = vmatpush.bf16.msra.mxu0 %v560
  %820 = vmatpush.bf16.msra.mxu0 %v559
  %821 = vmatmul.bf16.gmra.mxu0 %v97
  %v822 = vpop.f32.mrf.mxu0
  %v823 = vadd.f32 %v794, %v822
  %v824 = vpop.f32.mrf.mxu0
  %v825 = vadd.f32 %v796, %v824
  %826 = vmatmul.bf16.gmra.mxu0 %v105
  %v827 = vpop.f32.mrf.mxu0
  %v828 = vadd.f32 %v799, %v827
  %v829 = vpop.f32.mrf.mxu0
  %v830 = vadd.f32 %v801, %v829
  %831 = vmatmul.bf16.gmra.mxu0 %v113
  %v832 = vpop.f32.mrf.mxu0
  %v833 = vadd.f32 %v804, %v832
  %v834 = vpop.f32.mrf.mxu0
  %v835 = vadd.f32 %v806, %v834
  %836 = vmatmul.bf16.gmra.mxu0 %v121
  %v837 = vpop.f32.mrf.mxu0
  %v838 = vadd.f32 %v809, %v837
  %v839 = vpop.f32.mrf.mxu0
  %v840 = vadd.f32 %v811, %v839
  %841 = vdwg.mxu0
  %842 = vmatpush.bf16.msra.mxu0 %v574
  %843 = vmatpush.bf16.msra.mxu0 %v573
  %844 = vmatpush.bf16.msra.mxu0 %v572
  %845 = vmatpush.bf16.msra.mxu0 %v571
  %846 = vmatpush.bf16.msra.mxu0 %v570
  %847 = vmatpush.bf16.msra.mxu0 %v569
  %848 = vmatpush.bf16.msra.mxu0 %v568
  %849 = vmatpush.bf16.msra.mxu0 %v567
  %850 = vmatmul.bf16.gmra.mxu0 %v98
  %v851 = vpop.f32.mrf.mxu0
  %v852 = vadd.f32 %v823, %v851
  %v853 = vpop.f32.mrf.mxu0
  %v854 = vadd.f32 %v825, %v853
  %855 = vmatmul.bf16.gmra.mxu0 %v106
  %v856 = vpop.f32.mrf.mxu0
  %v857 = vadd.f32 %v828, %v856
  %v858 = vpop.f32.mrf.mxu0
  %v859 = vadd.f32 %v830, %v858
  %860 = vmatmul.bf16.gmra.mxu0 %v114
  %v861 = vpop.f32.mrf.mxu0
  %v862 = vadd.f32 %v833, %v861
  %v863 = vpop.f32.mrf.mxu0
  %v864 = vadd.f32 %v835, %v863
  %865 = vmatmul.bf16.gmra.mxu0 %v122
  %v866 = vpop.f32.mrf.mxu0
  %v867 = vadd.f32 %v838, %v866
  %v868 = vpop.f32.mrf.mxu0
  %v869 = vadd.f32 %v840, %v868
  %870 = vdwg.mxu0
  %v871 = vmax.f32 %v852, 0.0
  %v872 = vmax.f32 %v854, 0.0
  %v873 = vmax.f32 %v857, 0.0
  %v874 = vmax.f32 %v859, 0.0
  %v875 = vmax.f32 %v862, 0.0
  %v876 = vmax.f32 %v864, 0.0
  %v877 = vmax.f32 %v867, 0.0
  %v878 = vmax.f32 %v869, 0.0
  %v879 = vpack.c.bf16 %v872, %v871
  %v880 = vpack.c.bf16 %v874, %v873
  %v881 = vpack.c.bf16 %v876, %v875
  %v882 = vpack.c.bf16 %v878, %v877
  %v883 = vld [vmem:[%s3] sm:$0xf]
  %v884 = vld [vmem:[%s3 + $0x4] sm:$0xf]
  %v885 = vld [vmem:[%s3 + $0x8] sm:$0xf]
  %v886 = vld [vmem:[%s3 + $0xc] sm:$0xf]
  %v887 = vld [vmem:[%s3 + $0x10] sm:$0xf]
  %v888 = vld [vmem:[%s3 + $0x14] sm:$0xf]
  %v889 = vld [vmem:[%s3 + $0x18] sm:$0xf]
  %v890 = vld [vmem:[%s3 + $0x1c] sm:$0xf]
  %v891 = vld [vmem:[%s4] sm:$0x1]
  %v893 = vperm.slane %v891, 0
  %v903 = vunpack.c.l.b16 %v883
  %v904 = vunpack.c.l.b16 %v884
  %v905 = vunpack.c.l.b16 %v885
  %v906 = vunpack.c.l.b16 %v886
  %v907 = vunpack.c.l.b16 %v887
  %v908 = vunpack.c.l.b16 %v888
  %v909 = vunpack.c.l.b16 %v889
  %v910 = vunpack.c.l.b16 %v890
  %v911 = vpack.c.b16 %v904, %v903
  %v912 = vpack.c.b16 %v906, %v905
  %v913 = vpack.c.b16 %v908, %v907
  %v914 = vpack.c.b16 %v910, %v909
  %vm919 = vcmask 523264
  %v921 = vsel %vm919, %v879, 0
  %v924 = vsel %vm919, %v880, 0
  %v927 = vsel %vm919, %v881, 0
  %v930 = vsel %vm919, %v882, 0
  %932 = vmatpush.bf16.msra.mxu0 0
  %933 = vmatpush.bf16.msra.mxu0 0
  %934 = vmatpush.bf16.msra.mxu0 0
  %935 = vmatpush.bf16.msra.mxu0 0
  %936 = vmatpush.bf16.msra.mxu0 %v914
  %937 = vmatpush.bf16.msra.mxu0 %v913
  %938 = vmatpush.bf16.msra.mxu0 %v912
  %939 = vmatpush.bf16.msra.mxu0 %v911
  %940 = vmatmul.bf16.gmra.mxu0 %v921
  %v941 = vpop.f32.mrf.mxu0
  %v942 = vadd.f32 %v893, %v941
  %v943 = vpop.f32.mrf.mxu0
  %v944 = vadd.f32 %v893, %v943
  %945 = vmatmul.bf16.gmra.mxu0 %v924
  %v946 = vpop.f32.mrf.mxu0
  %v947 = vadd.f32 %v893, %v946
  %v948 = vpop.f32.mrf.mxu0
  %v949 = vadd.f32 %v893, %v948
  %950 = vmatmul.bf16.gmra.mxu0 %v927
  %v951 = vpop.f32.mrf.mxu0
  %v952 = vadd.f32 %v893, %v951
  %v953 = vpop.f32.mrf.mxu0
  %v954 = vadd.f32 %v893, %v953
  %955 = vmatmul.bf16.gmra.mxu0 %v930
  %v956 = vpop.f32.mrf.mxu0
  %v957 = vadd.f32 %v893, %v956
  %v958 = vpop.f32.mrf.mxu0
  %v959 = vadd.f32 %v893, %v958
  %960 = vdwg.mxu0
  %v961 = vmax.f32 %v942, 0.0
  %v962 = vmax.f32 %v944, 0.0
  %v963 = vmax.f32 %v947, 0.0
  %v964 = vmax.f32 %v949, 0.0
  %v965 = vmax.f32 %v952, 0.0
  %v966 = vmax.f32 %v954, 0.0
  %v967 = vmax.f32 %v957, 0.0
  %v968 = vmax.f32 %v959, 0.0
  %v969 = vpack.c.bf16 %v962, %v961
  %v970 = vpack.c.bf16 %v964, %v963
  %v971 = vpack.c.bf16 %v966, %v965
  %v972 = vpack.c.bf16 %v968, %v967
  %v973 = vld [vmem:[%s5] sm:$0xf]
  %v974 = vld [vmem:[%s5 + $0x4] sm:$0xf]
  %v975 = vld [vmem:[%s5 + $0x8] sm:$0xf]
  %v976 = vld [vmem:[%s5 + $0xc] sm:$0xf]
  %v977 = vld [vmem:[%s6] sm:$0x1]
  %v979 = vperm.slane %v977, 0
  %v985 = vunpack.c.l.b16 %v973
  %v986 = vunpack.c.l.b16 %v974
  %v987 = vunpack.c.l.b16 %v975
  %v988 = vunpack.c.l.b16 %v976
  %v989 = vpack.c.b16 %v986, %v985
  %v990 = vpack.c.b16 %v988, %v987
  %vm993 = vcmask 261120
  %v995 = vsel %vm993, %v969, 0
  %v998 = vsel %vm993, %v970, 0
  %v1001 = vsel %vm993, %v971, 0
  %v1004 = vsel %vm993, %v972, 0
  %1006 = vmatpush.bf16.msra.mxu0 0
  %1007 = vmatpush.bf16.msra.mxu0 0
  %1008 = vmatpush.bf16.msra.mxu0 0
  %1009 = vmatpush.bf16.msra.mxu0 0
  %1010 = vmatpush.bf16.msra.mxu0 0
  %1011 = vmatpush.bf16.msra.mxu0 0
  %1012 = vmatpush.bf16.msra.mxu0 %v990
  %1013 = vmatpush.bf16.msra.mxu0 %v989
  %1014 = vmatmul.bf16.gmra.mxu0 %v995
  %v1015 = vpop.f32.mrf.mxu0
  %v1016 = vadd.f32 %v979, %v1015
  %v1017 = vpop.f32.mrf.mxu0
  %v1018 = vadd.f32 %v979, %v1017
  %1019 = vmatmul.bf16.gmra.mxu0 %v998
  %v1020 = vpop.f32.mrf.mxu0
  %v1021 = vadd.f32 %v979, %v1020
  %v1022 = vpop.f32.mrf.mxu0
  %v1023 = vadd.f32 %v979, %v1022
  %1024 = vmatmul.bf16.gmra.mxu0 %v1001
  %v1025 = vpop.f32.mrf.mxu0
  %v1026 = vadd.f32 %v979, %v1025
  %v1027 = vpop.f32.mrf.mxu0
  %v1028 = vadd.f32 %v979, %v1027
  %1029 = vmatmul.bf16.gmra.mxu0 %v1004
  %v1030 = vpop.f32.mrf.mxu0
  %v1031 = vadd.f32 %v979, %v1030
  %v1032 = vpop.f32.mrf.mxu0
  %v1033 = vadd.f32 %v979, %v1032
  %1034 = vdwg.mxu0
  %vm1035 = vcmask 80896
  %1036 = vst.msk [vmem:[%s7] sm:$0xff] %vm1035, %v1016
  %1037 = vst.msk [vmem:[%s7 + $0x8] sm:$0xff] %vm1035, %v1018
  %1038 = vst.msk [vmem:[%s7 + $0x10] sm:$0xff] %vm1035, %v1021
  %1039 = vst.msk [vmem:[%s7 + $0x18] sm:$0xff] %vm1035, %v1023
  %1040 = vst.msk [vmem:[%s7 + $0x20] sm:$0xff] %vm1035, %v1026
  %1041 = vst.msk [vmem:[%s7 + $0x28] sm:$0xff] %vm1035, %v1028
  %1042 = vst.msk [vmem:[%s7 + $0x30] sm:$0xff] %vm1035, %v1031
  %1043 = vst.msk [vmem:[%s7 + $0x38] sm:$0xff] %vm1035, %v1033
  // Predicated region
  $region30: #{custom_mlp_forward.1} parent=0 // pred_check
    _
  $region31: #{custom_mlp_forward.1} parent=0 // pred_check_branch
    %1045 = sbr.rel (0) target = $region33
  $region32: #{custom_mlp_forward.1} parent=0 // pred_region
    _
  $region33: #{custom_mlp_forward.1} parent=0 // pred_fallthru
    _
  // Predicated region
  $region34: #{custom_mlp_forward.1} parent=0 // pred_check
    _
  $region35: #{custom_mlp_forward.1} parent=0 // pred_check_branch
    %1047 = sbr.rel (0) target = $region37
  $region36: #{custom_mlp_forward.1} parent=0 // pred_region
    _
  $region37: #{custom_mlp_forward.1} parent=0 // pred_fallthru
    _

</llo_original>
